<compile_context>
chip_gen: v7x
topology: tpu7x:2x2x1
jax: 0.10.0
libtpu: 0.0.40
codegen_flags: <defaults>
</compile_context>

<pallas_src>
import functools

import jax
import jax.numpy as jnp
from jax import lax
from jax.experimental import pallas as pl
from jax.experimental.pallas import tpu as pltpu

VARIANCE = 0.001

_N_UNIFORMS = 4          # Irwin-Hall order: sum of 4 U(0,1) -> approx normal
_LANE = 128
_SUBLANE = 8
_MAX_TILE_ROWS = 1024    # 1024 x 128 f32 = 512 KiB per block

# lowbias32-style mix constants, expressed as wrapped int32 Python ints.
_M1 = 0x7FEB352D
_M2 = 0x846CA68B - (1 << 32)
_GOLD = 0x9E3779B9 - (1 << 32)


def _mix32(v):
    """lowbias32-style integer avalanche hash on int32 (wrapping arithmetic).

    Logical right shifts are emulated with arithmetic shift + mask so only
    plain int32 VPU ops are used (portable to Mosaic and interpret mode).
    """
    v = v ^ ((v >> 16) & 0xFFFF)
    v = v * jnp.int32(_M1)
    v = v ^ ((v >> 15) & 0x1FFFF)
    v = v * jnp.int32(_M2)
    v = v ^ ((v >> 16) & 0xFFFF)
    return v


def _positive_sampling_kernel(variance, n_uniform, seed_ref, x_ref, o_ref):
    shape = x_ref.shape                       # (TILE_R, 128)
    tile_elems = shape[0] * shape[1]

    # Global flat element index of every element in this tile.
    row = lax.broadcasted_iota(jnp.int32, shape, 0)
    col = lax.broadcasted_iota(jnp.int32, shape, 1)
    gidx = pl.program_id(0) * tile_elems + row * shape[1] + col

    seed_mix = seed_ref[0] * jnp.int32(_GOLD)

    # Irwin-Hall: sum of n_uniform U(0,1) draws, centered and scaled to unit
    # variance.  Each draw hashes a distinct counter derived from the global
    # element index, the draw index, and the seed.
    acc = jnp.zeros(shape, jnp.float32)
    for k in range(n_uniform):
        ctr = gidx * n_uniform + k + seed_mix
        bits = _mix32(ctr)
        # low 23 bits -> uniform in [0, 1)
        u = (bits & 0x7FFFFF).astype(jnp.float32) * jnp.float32(1.0 / (1 << 23))
        acc = acc + u
    z = (acc - jnp.float32(0.5 * n_uniform)) * jnp.float32(
        (12.0 / n_uniform) ** 0.5)

    o_ref[...] = (x_ref[...].astype(jnp.float32)
                  + jnp.float32(variance) * z).astype(o_ref.dtype)


def positive_sampling(x, variance=VARIANCE, seed=0):
    """x + variance * N(0, 1)-approximate noise of the same shape."""
    orig_shape = x.shape
    orig_dtype = x.dtype
    flat = x.reshape(-1)
    n = flat.shape[0]

    rows = -(-n // _LANE)
    if rows >= _MAX_TILE_ROWS:
        tile_r = _MAX_TILE_ROWS
    else:
        tile_r = -(-rows // _SUBLANE) * _SUBLANE
    num_tiles = -(-rows // tile_r)
    rows_pad = num_tiles * tile_r
    padded_len = rows_pad * _LANE

    if padded_len != n:
        flat = jnp.pad(flat, (0, padded_len - n))
    x2d = flat.reshape(rows_pad, _LANE)

    seed_arr = jnp.array([seed], dtype=jnp.int32)
    kernel = functools.partial(_positive_sampling_kernel, float(variance),
                               _N_UNIFORMS)

    itemsize = jnp.dtype(orig_dtype).itemsize
    cost = pl.CostEstimate(
        flops=32 * padded_len,                     # hash + FMA work per element
        transcendentals=0,
        bytes_accessed=2 * itemsize * padded_len,  # read x + write out
    )

    out = pl.pallas_call(
        kernel,
        out_shape=jax.ShapeDtypeStruct((rows_pad, _LANE), orig_dtype),
        grid_spec=pltpu.PrefetchScalarGridSpec(
            num_scalar_prefetch=1,
            grid=(num_tiles,),
            in_specs=[pl.BlockSpec((tile_r, _LANE), lambda i, s: (i, 0))],
            out_specs=pl.BlockSpec((tile_r, _LANE), lambda i, s: (i, 0)),
        ),
        compiler_params=pltpu.CompilerParams(
            dimension_semantics=("parallel",)),
        cost_estimate=cost,
    )(seed_arr, x2d)

    out_flat = out.reshape(-1)
    if padded_len != n:
        out_flat = out_flat[:n]
    return out_flat.reshape(orig_shape)


if __name__ == "__main__":
    key = jax.random.PRNGKey(0)

    # Small NCHW input consistent with a conv-style feature map.
    x = jax.random.normal(key, (2, 4, 16, 16), dtype=jnp.float32)
    y = jax.block_until_ready(positive_sampling(x, variance=VARIANCE, seed=0))

    assert y.shape == x.shape and y.dtype == x.dtype
    noise = y - x
    max_dev = float(jnp.max(jnp.abs(noise)))
    std = float(jnp.std(noise))
    mean = float(jnp.mean(noise))
    assert 0.0 < max_dev < 0.01, f"unexpected noise magnitude: {max_dev}"
    assert 0.0005 < std < 0.002, f"unexpected noise std: {std}"
    assert abs(mean) < 2e-4, f"unexpected noise mean: {mean}"

    # Multi-tile path (grid > 1): tiles must get independent noise.
    xb = jax.random.normal(jax.random.PRNGKey(1), (4, 8, 128, 128),
                           dtype=jnp.float32)
    yb = jax.block_until_ready(positive_sampling(xb, variance=VARIANCE, seed=3))
    nb = (yb - xb).reshape(-1)
    tile_elems = _MAX_TILE_ROWS * _LANE
    t0 = nb[:tile_elems]
    t1 = nb[tile_elems:2 * tile_elems]
    assert 0.0005 < float(jnp.std(nb)) < 0.002
    assert not bool(jnp.allclose(t0, t1)), "tiles produced identical noise"

    # Padded / odd-size path.
    xo = jax.random.normal(jax.random.PRNGKey(2), (2, 3, 5, 7),
                           dtype=jnp.float32)
    yo = jax.block_until_ready(positive_sampling(xo, variance=VARIANCE, seed=7))
    assert yo.shape == xo.shape and yo.dtype == xo.dtype
    devo = float(jnp.max(jnp.abs(yo - xo)))
    assert 0.0 < devo < 0.01

    print("KERNEL_OK")
</pallas_src>

<mosaic_0001>
module attributes {stable_mosaic.version = 11 : i64} {
  func.func @_positive_sampling_kernel(%arg0: i32, %arg1: memref<1xi32, #tpu.memory_space<smem>>, %arg2: memref<16x128xf32, #tpu.memory_space<vmem>>, %arg3: memref<16x128xf32, #tpu.memory_space<vmem>>) attributes {dimension_semantics = [#tpu.dimension_semantics<parallel>], iteration_bounds = array<i64: 1>, scalar_prefetch = 1 : i64, scratch_operands = 0 : i64, tpu.core_type = #tpu.core_type<tc>, window_params = [{transform_indices = @transform_0, window_bounds = array<i64: 16, 128>}, {transform_indices = @transform_1, window_bounds = array<i64: 16, 128>}]} {
    %0 = tpu.iota {dimensions = array<i32: 0>} : vector<16x128xi32>
    %1 = tpu.iota {dimensions = array<i32: 1>} : vector<16x128xi32>
    %c2048_i32 = arith.constant 2048 : i32
    %2 = arith.muli %arg0, %c2048_i32 : i32
    %c128_i32 = arith.constant 128 : i32
    %3 = vector.broadcast %c128_i32 : i32 to vector<16x128xi32>
    %4 = arith.muli %0, %3 : vector<16x128xi32>
    %5 = vector.broadcast %2 : i32 to vector<16x128xi32>
    %6 = arith.addi %5, %4 : vector<16x128xi32>
    %7 = arith.addi %6, %1 : vector<16x128xi32>
    %c0 = arith.constant 0 : index
    %8 = memref.load %arg1[%c0] : memref<1xi32, #tpu.memory_space<smem>>
    %c-1640531527_i32 = arith.constant -1640531527 : i32
    %9 = arith.muli %8, %c-1640531527_i32 : i32
    %cst = arith.constant 0.000000e+00 : f32
    %10 = vector.broadcast %cst : f32 to vector<16x128xf32>
    %c4_i32 = arith.constant 4 : i32
    %11 = vector.broadcast %c4_i32 : i32 to vector<16x128xi32>
    %12 = arith.muli %7, %11 : vector<16x128xi32>
    %c0_i32 = arith.constant 0 : i32
    %13 = vector.broadcast %c0_i32 : i32 to vector<16x128xi32>
    %14 = arith.addi %12, %13 : vector<16x128xi32>
    %15 = vector.broadcast %9 : i32 to vector<16x128xi32>
    %16 = arith.addi %14, %15 : vector<16x128xi32>
    %c16_i32 = arith.constant 16 : i32
    %17 = vector.broadcast %c16_i32 : i32 to vector<16x128xi32>
    %18 = arith.shrsi %16, %17 : vector<16x128xi32>
    %c65535_i32 = arith.constant 65535 : i32
    %19 = vector.broadcast %c65535_i32 : i32 to vector<16x128xi32>
    %20 = arith.andi %18, %19 : vector<16x128xi32>
    %21 = arith.xori %16, %20 : vector<16x128xi32>
    %c2146121005_i32 = arith.constant 2146121005 : i32
    %22 = vector.broadcast %c2146121005_i32 : i32 to vector<16x128xi32>
    %23 = arith.muli %21, %22 : vector<16x128xi32>
    %c15_i32 = arith.constant 15 : i32
    %24 = vector.broadcast %c15_i32 : i32 to vector<16x128xi32>
    %25 = arith.shrsi %23, %24 : vector<16x128xi32>
    %c131071_i32 = arith.constant 131071 : i32
    %26 = vector.broadcast %c131071_i32 : i32 to vector<16x128xi32>
    %27 = arith.andi %25, %26 : vector<16x128xi32>
    %28 = arith.xori %23, %27 : vector<16x128xi32>
    %c-2073254261_i32 = arith.constant -2073254261 : i32
    %29 = vector.broadcast %c-2073254261_i32 : i32 to vector<16x128xi32>
    %30 = arith.muli %28, %29 : vector<16x128xi32>
    %c16_i32_0 = arith.constant 16 : i32
    %31 = vector.broadcast %c16_i32_0 : i32 to vector<16x128xi32>
    %32 = arith.shrsi %30, %31 : vector<16x128xi32>
    %c65535_i32_1 = arith.constant 65535 : i32
    %33 = vector.broadcast %c65535_i32_1 : i32 to vector<16x128xi32>
    %34 = arith.andi %32, %33 : vector<16x128xi32>
    %35 = arith.xori %30, %34 : vector<16x128xi32>
    %c8388607_i32 = arith.constant 8388607 : i32
    %36 = vector.broadcast %c8388607_i32 : i32 to vector<16x128xi32>
    %37 = arith.andi %35, %36 : vector<16x128xi32>
    %38 = arith.sitofp %37 : vector<16x128xi32> to vector<16x128xf32>
    %cst_2 = arith.constant 1.1920929E-7 : f32
    %39 = vector.broadcast %cst_2 : f32 to vector<16x128xf32>
    %40 = arith.mulf %38, %39 : vector<16x128xf32>
    %41 = arith.addf %10, %40 : vector<16x128xf32>
    %c4_i32_3 = arith.constant 4 : i32
    %42 = vector.broadcast %c4_i32_3 : i32 to vector<16x128xi32>
    %43 = arith.muli %7, %42 : vector<16x128xi32>
    %c1_i32 = arith.constant 1 : i32
    %44 = vector.broadcast %c1_i32 : i32 to vector<16x128xi32>
    %45 = arith.addi %43, %44 : vector<16x128xi32>
    %46 = vector.broadcast %9 : i32 to vector<16x128xi32>
    %47 = arith.addi %45, %46 : vector<16x128xi32>
    %c16_i32_4 = arith.constant 16 : i32
    %48 = vector.broadcast %c16_i32_4 : i32 to vector<16x128xi32>
    %49 = arith.shrsi %47, %48 : vector<16x128xi32>
    %c65535_i32_5 = arith.constant 65535 : i32
    %50 = vector.broadcast %c65535_i32_5 : i32 to vector<16x128xi32>
    %51 = arith.andi %49, %50 : vector<16x128xi32>
    %52 = arith.xori %47, %51 : vector<16x128xi32>
    %c2146121005_i32_6 = arith.constant 2146121005 : i32
    %53 = vector.broadcast %c2146121005_i32_6 : i32 to vector<16x128xi32>
    %54 = arith.muli %52, %53 : vector<16x128xi32>
    %c15_i32_7 = arith.constant 15 : i32
    %55 = vector.broadcast %c15_i32_7 : i32 to vector<16x128xi32>
    %56 = arith.shrsi %54, %55 : vector<16x128xi32>
    %c131071_i32_8 = arith.constant 131071 : i32
    %57 = vector.broadcast %c131071_i32_8 : i32 to vector<16x128xi32>
    %58 = arith.andi %56, %57 : vector<16x128xi32>
    %59 = arith.xori %54, %58 : vector<16x128xi32>
    %c-2073254261_i32_9 = arith.constant -2073254261 : i32
    %60 = vector.broadcast %c-2073254261_i32_9 : i32 to vector<16x128xi32>
    %61 = arith.muli %59, %60 : vector<16x128xi32>
    %c16_i32_10 = arith.constant 16 : i32
    %62 = vector.broadcast %c16_i32_10 : i32 to vector<16x128xi32>
    %63 = arith.shrsi %61, %62 : vector<16x128xi32>
    %c65535_i32_11 = arith.constant 65535 : i32
    %64 = vector.broadcast %c65535_i32_11 : i32 to vector<16x128xi32>
    %65 = arith.andi %63, %64 : vector<16x128xi32>
    %66 = arith.xori %61, %65 : vector<16x128xi32>
    %c8388607_i32_12 = arith.constant 8388607 : i32
    %67 = vector.broadcast %c8388607_i32_12 : i32 to vector<16x128xi32>
    %68 = arith.andi %66, %67 : vector<16x128xi32>
    %69 = arith.sitofp %68 : vector<16x128xi32> to vector<16x128xf32>
    %cst_13 = arith.constant 1.1920929E-7 : f32
    %70 = vector.broadcast %cst_13 : f32 to vector<16x128xf32>
    %71 = arith.mulf %69, %70 : vector<16x128xf32>
    %72 = arith.addf %41, %71 : vector<16x128xf32>
    %c4_i32_14 = arith.constant 4 : i32
    %73 = vector.broadcast %c4_i32_14 : i32 to vector<16x128xi32>
    %74 = arith.muli %7, %73 : vector<16x128xi32>
    %c2_i32 = arith.constant 2 : i32
    %75 = vector.broadcast %c2_i32 : i32 to vector<16x128xi32>
    %76 = arith.addi %74, %75 : vector<16x128xi32>
    %77 = vector.broadcast %9 : i32 to vector<16x128xi32>
    %78 = arith.addi %76, %77 : vector<16x128xi32>
    %c16_i32_15 = arith.constant 16 : i32
    %79 = vector.broadcast %c16_i32_15 : i32 to vector<16x128xi32>
    %80 = arith.shrsi %78, %79 : vector<16x128xi32>
    %c65535_i32_16 = arith.constant 65535 : i32
    %81 = vector.broadcast %c65535_i32_16 : i32 to vector<16x128xi32>
    %82 = arith.andi %80, %81 : vector<16x128xi32>
    %83 = arith.xori %78, %82 : vector<16x128xi32>
    %c2146121005_i32_17 = arith.constant 2146121005 : i32
    %84 = vector.broadcast %c2146121005_i32_17 : i32 to vector<16x128xi32>
    %85 = arith.muli %83, %84 : vector<16x128xi32>
    %c15_i32_18 = arith.constant 15 : i32
    %86 = vector.broadcast %c15_i32_18 : i32 to vector<16x128xi32>
    %87 = arith.shrsi %85, %86 : vector<16x128xi32>
    %c131071_i32_19 = arith.constant 131071 : i32
    %88 = vector.broadcast %c131071_i32_19 : i32 to vector<16x128xi32>
    %89 = arith.andi %87, %88 : vector<16x128xi32>
    %90 = arith.xori %85, %89 : vector<16x128xi32>
    %c-2073254261_i32_20 = arith.constant -2073254261 : i32
    %91 = vector.broadcast %c-2073254261_i32_20 : i32 to vector<16x128xi32>
    %92 = arith.muli %90, %91 : vector<16x128xi32>
    %c16_i32_21 = arith.constant 16 : i32
    %93 = vector.broadcast %c16_i32_21 : i32 to vector<16x128xi32>
    %94 = arith.shrsi %92, %93 : vector<16x128xi32>
    %c65535_i32_22 = arith.constant 65535 : i32
    %95 = vector.broadcast %c65535_i32_22 : i32 to vector<16x128xi32>
    %96 = arith.andi %94, %95 : vector<16x128xi32>
    %97 = arith.xori %92, %96 : vector<16x128xi32>
    %c8388607_i32_23 = arith.constant 8388607 : i32
    %98 = vector.broadcast %c8388607_i32_23 : i32 to vector<16x128xi32>
    %99 = arith.andi %97, %98 : vector<16x128xi32>
    %100 = arith.sitofp %99 : vector<16x128xi32> to vector<16x128xf32>
    %cst_24 = arith.constant 1.1920929E-7 : f32
    %101 = vector.broadcast %cst_24 : f32 to vector<16x128xf32>
    %102 = arith.mulf %100, %101 : vector<16x128xf32>
    %103 = arith.addf %72, %102 : vector<16x128xf32>
    %c4_i32_25 = arith.constant 4 : i32
    %104 = vector.broadcast %c4_i32_25 : i32 to vector<16x128xi32>
    %105 = arith.muli %7, %104 : vector<16x128xi32>
    %c3_i32 = arith.constant 3 : i32
    %106 = vector.broadcast %c3_i32 : i32 to vector<16x128xi32>
    %107 = arith.addi %105, %106 : vector<16x128xi32>
    %108 = vector.broadcast %9 : i32 to vector<16x128xi32>
    %109 = arith.addi %107, %108 : vector<16x128xi32>
    %c16_i32_26 = arith.constant 16 : i32
    %110 = vector.broadcast %c16_i32_26 : i32 to vector<16x128xi32>
    %111 = arith.shrsi %109, %110 : vector<16x128xi32>
    %c65535_i32_27 = arith.constant 65535 : i32
    %112 = vector.broadcast %c65535_i32_27 : i32 to vector<16x128xi32>
    %113 = arith.andi %111, %112 : vector<16x128xi32>
    %114 = arith.xori %109, %113 : vector<16x128xi32>
    %c2146121005_i32_28 = arith.constant 2146121005 : i32
    %115 = vector.broadcast %c2146121005_i32_28 : i32 to vector<16x128xi32>
    %116 = arith.muli %114, %115 : vector<16x128xi32>
    %c15_i32_29 = arith.constant 15 : i32
    %117 = vector.broadcast %c15_i32_29 : i32 to vector<16x128xi32>
    %118 = arith.shrsi %116, %117 : vector<16x128xi32>
    %c131071_i32_30 = arith.constant 131071 : i32
    %119 = vector.broadcast %c131071_i32_30 : i32 to vector<16x128xi32>
    %120 = arith.andi %118, %119 : vector<16x128xi32>
    %121 = arith.xori %116, %120 : vector<16x128xi32>
    %c-2073254261_i32_31 = arith.constant -2073254261 : i32
    %122 = vector.broadcast %c-2073254261_i32_31 : i32 to vector<16x128xi32>
    %123 = arith.muli %121, %122 : vector<16x128xi32>
    %c16_i32_32 = arith.constant 16 : i32
    %124 = vector.broadcast %c16_i32_32 : i32 to vector<16x128xi32>
    %125 = arith.shrsi %123, %124 : vector<16x128xi32>
    %c65535_i32_33 = arith.constant 65535 : i32
    %126 = vector.broadcast %c65535_i32_33 : i32 to vector<16x128xi32>
    %127 = arith.andi %125, %126 : vector<16x128xi32>
    %128 = arith.xori %123, %127 : vector<16x128xi32>
    %c8388607_i32_34 = arith.constant 8388607 : i32
    %129 = vector.broadcast %c8388607_i32_34 : i32 to vector<16x128xi32>
    %130 = arith.andi %128, %129 : vector<16x128xi32>
    %131 = arith.sitofp %130 : vector<16x128xi32> to vector<16x128xf32>
    %cst_35 = arith.constant 1.1920929E-7 : f32
    %132 = vector.broadcast %cst_35 : f32 to vector<16x128xf32>
    %133 = arith.mulf %131, %132 : vector<16x128xf32>
    %134 = arith.addf %103, %133 : vector<16x128xf32>
    %cst_36 = arith.constant 2.000000e+00 : f32
    %135 = vector.broadcast %cst_36 : f32 to vector<16x128xf32>
    %136 = arith.subf %134, %135 : vector<16x128xf32>
    %cst_37 = arith.constant 1.73205078 : f32
    %137 = vector.broadcast %cst_37 : f32 to vector<16x128xf32>
    %138 = arith.mulf %136, %137 : vector<16x128xf32>
    %c0_38 = arith.constant 0 : index
    %c0_39 = arith.constant 0 : index
    %139 = vector.load %arg2[%c0_38, %c0_39] : memref<16x128xf32, #tpu.memory_space<vmem>>, vector<16x128xf32>
    %cst_40 = arith.constant 1.000000e-03 : f32
    %140 = vector.broadcast %cst_40 : f32 to vector<16x128xf32>
    %141 = arith.mulf %140, %138 : vector<16x128xf32>
    %142 = arith.addf %139, %141 : vector<16x128xf32>
    %c0_41 = arith.constant 0 : index
    %c0_42 = arith.constant 0 : index
    %143 = vector.load %arg3[%c0_41, %c0_42] : memref<16x128xf32, #tpu.memory_space<vmem>>, vector<16x128xf32>
    tpu.vector_store %arg3[%c0_41, %c0_42], %142 {strides = array<i32>} : memref<16x128xf32, #tpu.memory_space<vmem>>, vector<16x128xf32>,
    return
  }
  func.func @transform_0(%arg0: i32, %arg1: memref<1xi32, #tpu.memory_space<smem>>) -> (i32, i32) {
    %c0_i32 = arith.constant 0 : i32
    %c0_i32_0 = arith.constant 0 : i32
    return %arg0, %c0_i32 : i32, i32
  }
  func.func @transform_1(%arg0: i32, %arg1: memref<1xi32, #tpu.memory_space<smem>>) -> (i32, i32) {
    %c0_i32 = arith.constant 0 : i32
    %c0_i32_0 = arith.constant 0 : i32
    return %arg0, %c0_i32 : i32, i32
  }
}

</mosaic_0001>

<llo_original>
// kernel: tpu_custom_call.1
$region0: #{tpu_custom_call.1}
  #allocation0 [shape = 'u32[]', space=smem, size = 0x4, offset = 0x4, fixed_abs, tag = 'smem constant byte address 0x4 - core index']
  #allocation1 [shape = 'u32[144,128]{1,0:T(1,128)}', space=vmem, size = 0x12000, scoped, tag = 'internal scratch']
  #allocation2 [shape = 's32[1]{0}', space=sflag, size = 0x4, scoped, tag = 'scoped memory for tpu_custom_call.1']
  #allocation3 [shape = 's32[1]{0:T(128)S(6)}', space=smem, size = 0x200, scoped, tag = 'prefetched SMEM operand 0']
  %s0 = inlined_call_operand.<no memory space> [shape: s32[1], index: 0, kind: input, shape index: {}]
  %s1 = inlined_call_operand.hbm [shape: f32[16,128], index: 1, kind: input, shape index: {}]
  %s2 = inlined_call_operand.hbm [shape: f32[16,128], index: 2, kind: output, shape index: {}]
  %s3 = sld [smem:[#allocation0]]
  $region18: #{tpu_custom_call.1} parent=0
    _
  %s5 = ssub.s32 1, %s3
  %s6 = scalar_select 0, %s5, %s3
  %7 = sst [smem:[#allocation3]] %s0
  $region1: #{tpu_custom_call.1} parent=0
    #allocation4 [shape = 'u8[8192]{0}', space=vmem, size = 0x2000, scoped, tag = 'input window, operand 1, single buffered']
    #allocation5 [shape = 's32[1]{0}', space=sflag, size = 0x4, scoped, tag = 'scoped memory for tpu_custom_call.1']
    #allocation6 [shape = 's32[1]{0}', space=sflag, size = 0x4, scoped, tag = 'scoped memory for tpu_custom_call.1']
    #allocation7 [shape = 'u8[8192]{0}', space=vmem, size = 0x2000, scoped, tag = 'output window, operand 0, single buffered']
    %8 = vsyncpa [#allocation5], 0
    %9 = vsyncpa [#allocation6], 0
    // Predicated region
    $region2: #{tpu_custom_call.1} parent=1 // pred_check
      _
    $region3: #{tpu_custom_call.1} parent=1 // pred_check_branch
      %11 = sbr.rel (0) target = $region5
    $region4: #{tpu_custom_call.1} parent=1 // pred_region
      %s13 = ssub.s32 256, 256
      %14 = vsyncadd [#allocation5], %s13
      %s15 = sshll.u32 [#allocation4], 4
      %s16 = int_to_ptr.vmem [resolvable:$true] %s15
      %21 = dma.hbm_to_vmem [thread:$0]  %s1, 256, %s16, [#allocation5], 128, 128, 8
    $region5: #{tpu_custom_call.1} parent=1 // pred_fallthru
      _
    // Predicated region
    $region6: #{tpu_custom_call.1} parent=1 // pred_check
      _
    $region7: #{tpu_custom_call.1} parent=1 // pred_check_branch
      %23 = sbr.rel (0) target = $region9
    $region8: #{tpu_custom_call.1} parent=1 // pred_region
      %24 = dma.done [#allocation5], 256
    $region9: #{tpu_custom_call.1} parent=1 // pred_fallthru
      _
    %v25 = vlaneseq
    %v26 = vshrl.u32 %v25, 7
    %v27 = vadd.s32 %v26, 8
    %v28 = vlaneseq
    %v29 = vand.u32 %v28, 127
    %s30 = smul.u32 0, 2048
    %v31 = vmul.u32 %v26, 128
    %v32 = vmul.u32 %v27, 128
    %v33 = vstv %s30
    %v34 = vadd.s32 %v33, %v31
    %v35 = vadd.s32 %v33, %v32
    %v36 = vadd.s32 %v34, %v29
    %v37 = vadd.s32 %v35, %v29
    %s38 = sld [smem:[#allocation3]]
    %s39 = smul.u32 %s38, 2654435769
    %v40 = vmul.u32 %v36, 4
    %v41 = vmul.u32 %v37, 4
    %v42 = vstv %s39
    %v43 = vadd.s32 %v40, %v42
    %v44 = vadd.s32 %v41, %v42
    %v45 = vshra.s32 %v43, 16
    %v46 = vshra.s32 %v44, 16
    %v47 = vand.u32 %v45, 65535
    %v48 = vand.u32 %v46, 65535
    %v49 = vxor.u32 %v43, %v47
    %v50 = vxor.u32 %v44, %v48
    %v51 = vmul.u32 %v49, 2146121005
    %v52 = vmul.u32 %v50, 2146121005
    %v53 = vshra.s32 %v51, 15
    %v54 = vshra.s32 %v52, 15
    %v55 = vand.u32 %v53, 131071
    %v56 = vand.u32 %v54, 131071
    %v57 = vxor.u32 %v51, %v55
    %v58 = vxor.u32 %v52, %v56
    %v59 = vmul.u32 %v57, 2221713035
    %v60 = vmul.u32 %v58, 2221713035
    %v61 = vshra.s32 %v59, 16
    %v62 = vshra.s32 %v60, 16
    %v63 = vand.u32 %v61, 65535
    %v64 = vand.u32 %v62, 65535
    %v65 = vxor.u32 %v59, %v63
    %v66 = vxor.u32 %v60, %v64
    %v67 = vand.u32 %v65, 8388607
    %v68 = vand.u32 %v66, 8388607
    %v69 = vcvt.s32.f32 %v67
    %v70 = vcvt.s32.f32 %v68
    %v71 = vmul.f32 %v69, 1.1920929e-07
    %v72 = vmul.f32 %v70, 1.1920929e-07
    %v73 = vadd.f32 %v71, 0.0
    %v74 = vadd.f32 %v72, 0.0
    %v75 = vadd.s32 %v40, 1
    %v76 = vadd.s32 %v41, 1
    %v77 = vadd.s32 %v75, %v42
    %v78 = vadd.s32 %v76, %v42
    %v79 = vshra.s32 %v77, 16
    %v80 = vshra.s32 %v78, 16
    %v81 = vand.u32 %v79, 65535
    %v82 = vand.u32 %v80, 65535
    %v83 = vxor.u32 %v77, %v81
    %v84 = vxor.u32 %v78, %v82
    %v85 = vmul.u32 %v83, 2146121005
    %v86 = vmul.u32 %v84, 2146121005
    %v87 = vshra.s32 %v85, 15
    %v88 = vshra.s32 %v86, 15
    %v89 = vand.u32 %v87, 131071
    %v90 = vand.u32 %v88, 131071
    %v91 = vxor.u32 %v85, %v89
    %v92 = vxor.u32 %v86, %v90
    %v93 = vmul.u32 %v91, 2221713035
    %v94 = vmul.u32 %v92, 2221713035
    %v95 = vshra.s32 %v93, 16
    %v96 = vshra.s32 %v94, 16
    %v97 = vand.u32 %v95, 65535
    %v98 = vand.u32 %v96, 65535
    %v99 = vxor.u32 %v93, %v97
    %v100 = vxor.u32 %v94, %v98
    %v101 = vand.u32 %v99, 8388607
    %v102 = vand.u32 %v100, 8388607
    %v103 = vcvt.s32.f32 %v101
    %v104 = vcvt.s32.f32 %v102
    %v105 = vmul.f32 %v103, 1.1920929e-07
    %v106 = vmul.f32 %v104, 1.1920929e-07
    %v107 = vadd.f32 %v73, %v105
    %v108 = vadd.f32 %v74, %v106
    %v109 = vadd.s32 %v40, 2
    %v110 = vadd.s32 %v41, 2
    %v111 = vadd.s32 %v109, %v42
    %v112 = vadd.s32 %v110, %v42
    %v113 = vshra.s32 %v111, 16
    %v114 = vshra.s32 %v112, 16
    %v115 = vand.u32 %v113, 65535
    %v116 = vand.u32 %v114, 65535
    %v117 = vxor.u32 %v111, %v115
    %v118 = vxor.u32 %v112, %v116
    %v119 = vmul.u32 %v117, 2146121005
    %v120 = vmul.u32 %v118, 2146121005
    %v121 = vshra.s32 %v119, 15
    %v122 = vshra.s32 %v120, 15
    %v123 = vand.u32 %v121, 131071
    %v124 = vand.u32 %v122, 131071
    %v125 = vxor.u32 %v119, %v123
    %v126 = vxor.u32 %v120, %v124
    %v127 = vmul.u32 %v125, 2221713035
    %v128 = vmul.u32 %v126, 2221713035
    %v129 = vshra.s32 %v127, 16
    %v130 = vshra.s32 %v128, 16
    %v131 = vand.u32 %v129, 65535
    %v132 = vand.u32 %v130, 65535
    %v133 = vxor.u32 %v127, %v131
    %v134 = vxor.u32 %v128, %v132
    %v135 = vand.u32 %v133, 8388607
    %v136 = vand.u32 %v134, 8388607
    %v137 = vcvt.s32.f32 %v135
    %v138 = vcvt.s32.f32 %v136
    %v139 = vmul.f32 %v137, 1.1920929e-07
    %v140 = vmul.f32 %v138, 1.1920929e-07
    %v141 = vadd.f32 %v107, %v139
    %v142 = vadd.f32 %v108, %v140
    %v143 = vadd.s32 %v40, 3
    %v144 = vadd.s32 %v41, 3
    %v145 = vadd.s32 %v143, %v42
    %v146 = vadd.s32 %v144, %v42
    %v147 = vshra.s32 %v145, 16
    %v148 = vshra.s32 %v146, 16
    %v149 = vand.u32 %v147, 65535
    %v150 = vand.u32 %v148, 65535
    %v151 = vxor.u32 %v145, %v149
    %v152 = vxor.u32 %v146, %v150
    %v153 = vmul.u32 %v151, 2146121005
    %v154 = vmul.u32 %v152, 2146121005
    %v155 = vshra.s32 %v153, 15
    %v156 = vshra.s32 %v154, 15
    %v157 = vand.u32 %v155, 131071
    %v158 = vand.u32 %v156, 131071
    %v159 = vxor.u32 %v153, %v157
    %v160 = vxor.u32 %v154, %v158
    %v161 = vmul.u32 %v159, 2221713035
    %v162 = vmul.u32 %v160, 2221713035
    %v163 = vshra.s32 %v161, 16
    %v164 = vshra.s32 %v162, 16
    %v165 = vand.u32 %v163, 65535
    %v166 = vand.u32 %v164, 65535
    %v167 = vxor.u32 %v161, %v165
    %v168 = vxor.u32 %v162, %v166
    %v169 = vand.u32 %v167, 8388607
    %v170 = vand.u32 %v168, 8388607
    %v171 = vcvt.s32.f32 %v169
    %v172 = vcvt.s32.f32 %v170
    %v173 = vmul.f32 %v171, 1.1920929e-07
    %v174 = vmul.f32 %v172, 1.1920929e-07
    %v175 = vadd.f32 %v141, %v173
    %v176 = vadd.f32 %v142, %v174
    %v177 = vsub.f32 %v175, 2.0
    %v178 = vsub.f32 %v176, 2.0
    %v179 = vmul.f32 %v177, 1.7320508
    %v180 = vmul.f32 %v178, 1.7320508
    %v181 = vld [vmem:[#allocation4] sm:$0xff]
    %v182 = vld [vmem:[#allocation4 + $0x8] sm:$0xff]
    %v183 = vmul.f32 %v179, 0.001
    %v184 = vmul.f32 %v180, 0.001
    %v185 = vadd.f32 %v181, %v183
    %v186 = vadd.f32 %v182, %v184
    %187 = vst [vmem:[#allocation7] sm:$0xff] %v185
    %188 = vst [vmem:[#allocation7 + $0x8] sm:$0xff] %v186
    // Predicated region
    $region10: #{tpu_custom_call.1} parent=1 // pred_check
      _
    $region11: #{tpu_custom_call.1} parent=1 // pred_check_branch
      %190 = sbr.rel (0) target = $region13
    $region12: #{tpu_custom_call.1} parent=1 // pred_region
      %s192 = ssub.s32 256, 256
      %193 = vsyncadd [#allocation6], %s192
      %s194 = sshll.u32 [#allocation7], 4
      %s195 = int_to_ptr.vmem [resolvable:$true] %s194
      %200 = dma.vmem_to_hbm [thread:$0]  %s195, 256, %s2, [#allocation6], 128, 128, 8
    $region13: #{tpu_custom_call.1} parent=1 // pred_fallthru
      _
    // Predicated region
    $region14: #{tpu_custom_call.1} parent=1 // pred_check
      _
    $region15: #{tpu_custom_call.1} parent=1 // pred_check_branch
      %202 = sbr.rel (0) target = $region17
    $region16: #{tpu_custom_call.1} parent=1 // pred_region
      %203 = dma.done [#allocation6], 256
    $region17: #{tpu_custom_call.1} parent=1 // pred_fallthru
      _
    %204 = vsyncpa [#allocation5], 1
    %205 = vsyncpa [#allocation6], 1

</llo_original>
